<compile_context>
chip_gen: v7x
topology: tpu7x:2x2x1
jax: 0.10.0
libtpu: 0.0.40
codegen_flags: <defaults>
</compile_context>

<pallas_src>
import jax
import jax.numpy as jnp
from jax.experimental import pallas as pl
from jax.experimental.pallas import tpu as pltpu


def _scm_kernel(mblk_ref, e_ref, w1_ref, b1_ref, w2_ref, b2_ref, out_ref):
    # mblk_ref: (R, R)       kron(I_TB, (I - A^T)^{-1}), R = TB*N
    # e_ref:    (R, N)       eps rows for this batch tile (first N feature cols only)
    # w1_ref:   (N, N*H4)    node-selecting FC1 weights (w1[i] in lanes i*H4:(i+1)*H4)
    # b1_ref:   (1, N*H4)    FC1 biases, flattened
    # w2_ref:   (N*H4, N*H)  block-diagonal FC2 weights (already transposed)
    # b2_ref:   (1, N*H)     FC2 biases, flattened
    # out_ref:  (R, N*H)     concatenated z for this batch tile (lane-dense slab)
    h = jnp.dot(mblk_ref[...], e_ref[...],
                preferred_element_type=jnp.float32)               # (R, N)
    hid = jnp.dot(h, w1_ref[...],
                  preferred_element_type=jnp.float32) + b1_ref[...]   # (R, N*H4)
    hid = jnp.maximum(hid, 0.0)
    z = jnp.dot(hid, w2_ref[...],
                preferred_element_type=jnp.float32) + b2_ref[...]     # (R, N*H)
    out_ref[...] = z.astype(out_ref.dtype)


def _choose_batch_tile(B, N):
    """Largest divisor of B keeping >=2 grid steps (v7x: 2 TCs) and, when
    possible, a sublane-full (multiple-of-8) row tile."""
    divs = [d for d in range(1, B + 1) if B % d == 0]
    return max(divs, key=lambda d: ((B // d) >= 2, (d * N) % 8 == 0, d))


def scm_forward(eps, weight_dag, w1, b1, w2, b2, *, alpha=3.0, batch_tile=None):
    """eps: [B, N, D] with D >= N. Returns z: [B, N, N*hidden_dim]."""
    B, N, D = eps.shape
    H4 = b1.shape[-1]
    H = b2.shape[-1]
    assert D >= N, "split(dim=2) is indexed up to hidden_num in the reference"

    # TODO(synk): the (N x N) matrix inverse has no clean Pallas equivalent; this
    # tiny linear-algebra step stays in plain JAX as parameter/glue setup.
    A = jax.nn.relu(jnp.tanh(alpha * weight_dag))                   # amplified DAG
    M = jnp.linalg.inv(jnp.eye(N, dtype=weight_dag.dtype) - A.T)    # (I - A^T)^{-1}

    TB = batch_tile if batch_tile is not None else _choose_batch_tile(B, N)
    assert B % TB == 0
    R = TB * N                                                      # rows per grid step

    # --- wrapper-side layout plumbing (all tiny, parameter-derived) ---
    m_blk = jnp.kron(jnp.eye(TB, dtype=M.dtype), M)                 # (R, R) block-diag
    e_rows = eps[:, :, :N].reshape(B * N, N)                        # only the N used cols
    eyeN = jnp.eye(N, dtype=w1.dtype)
    w1sel = (eyeN[:, :, None] * w1[None, :, :]).reshape(N, N * H4)  # (N, N*H4)
    b1_flat = b1.reshape(1, N * H4)
    w2t = jnp.transpose(w2, (0, 2, 1))                              # (N, H4, H)
    w2blk = jnp.einsum('ij,ikm->ikjm', eyeN, w2t).reshape(N * H4, N * H)
    b2_flat = b2.reshape(1, N * H)

    z_rows = pl.pallas_call(
        _scm_kernel,
        out_shape=jax.ShapeDtypeStruct((B * N, N * H), eps.dtype),
        grid=(B // TB,),
        in_specs=[
            pl.BlockSpec((R, R), lambda g: (0, 0)),           # block-diag M, resident
            pl.BlockSpec((R, N), lambda g: (g, 0)),           # eps rows, one tile per step
            pl.BlockSpec((N, N * H4), lambda g: (0, 0)),      # packed FC1 weights
            pl.BlockSpec((1, N * H4), lambda g: (0, 0)),      # FC1 biases
            pl.BlockSpec((N * H4, N * H), lambda g: (0, 0)),  # block-diag FC2 weights
            pl.BlockSpec((1, N * H), lambda g: (0, 0)),       # FC2 biases
        ],
        out_specs=pl.BlockSpec((R, N * H), lambda g: (g, 0)),
        compiler_params=pltpu.CompilerParams(
            dimension_semantics=("parallel",)),
    )(m_blk, e_rows, w1sel, b1_flat, w2blk, b2_flat)

    return z_rows.reshape(B, N, N * H)


def scm_reference(eps, weight_dag, w1, b1, w2, b2, alpha=3.0):
    """Pure-JAX reference mirroring the PyTorch forward (nonlinear path)."""
    B, N, D = eps.shape
    A = jax.nn.relu(jnp.tanh(alpha * weight_dag))
    M = jnp.linalg.inv(jnp.eye(N, dtype=weight_dag.dtype) - A.T)
    h = jnp.einsum('ij,bjd->bid', M, eps)                           # (B, N, D)
    zs = []
    for i in range(N):
        s = h[:, :, i:i + 1]                                        # (B, N, 1)
        hid = jax.nn.relu(s * w1[i][None, None, :] + b1[i][None, None, :])   # (B, N, H4)
        zi = jnp.einsum('bnk,hk->bnh', hid, w2[i]) + b2[i][None, None, :]    # (B, N, H)
        zs.append(zi)
    return jnp.concatenate(zs, axis=-1)                             # (B, N, N*H)


if __name__ == "__main__":
    # Small shapes consistent with the module: in_dim = 1 (forced by split(dim=2)),
    # hidden_dim = 32, hidden_num = 4, eps: [batch=8, num=4, dim=8] (dim > num
    # exercises the "only DMA the used columns" path).
    B, N, D, H = 8, 4, 8, 32
    H4 = H // 4

    key = jax.random.PRNGKey(0)
    k = jax.random.split(key, 6)
    weight_dag = jax.random.normal(k[0], (N, N), jnp.float32)        # nn.Parameter randn
    eps = jax.random.normal(k[1], (B, N, D), jnp.float32)
    w1 = 0.5 * jax.random.normal(k[2], (N, H4), jnp.float32)         # FC1.weight (H4,1) squeezed, stacked over nodes
    b1 = 0.1 * jax.random.normal(k[3], (N, H4), jnp.float32)         # FC1.bias
    w2 = 0.3 * jax.random.normal(k[4], (N, H, H4), jnp.float32)      # FC2.weight, stacked over nodes
    b2 = 0.1 * jax.random.normal(k[5], (N, H), jnp.float32)          # FC2.bias

    z = scm_forward(eps, weight_dag, w1, b1, w2, b2)
    z = jax.block_until_ready(z)

    z_ref = scm_reference(eps, weight_dag, w1, b1, w2, b2)
    assert z.shape == (B, N, N * H), z.shape
    assert jnp.allclose(z, z_ref, rtol=1e-5, atol=1e-4), "mismatch vs reference"

    print("KERNEL_OK")
</pallas_src>

<mosaic_0001>
module attributes {stable_mosaic.version = 11 : i64} {
  func.func @_scm_kernel(%arg0: i32, %arg1: memref<16x16xf32, #tpu.memory_space<vmem>>, %arg2: memref<16x4xf32, #tpu.memory_space<vmem>>, %arg3: memref<4x32xf32, #tpu.memory_space<vmem>>, %arg4: memref<1x32xf32, #tpu.memory_space<vmem>>, %arg5: memref<32x128xf32, #tpu.memory_space<vmem>>, %arg6: memref<1x128xf32, #tpu.memory_space<vmem>>, %arg7: memref<16x128xf32, #tpu.memory_space<vmem>>) attributes {dimension_semantics = [#tpu.dimension_semantics<parallel>], iteration_bounds = array<i64: 2>, scalar_prefetch = 0 : i64, scratch_operands = 0 : i64, tpu.core_type = #tpu.core_type<tc>, window_params = [{pipeline_mode = #tpu.pipeline_mode<synchronous>, transform_indices = @transform_0, window_bounds = array<i64: 16, 16>}, {transform_indices = @transform_1, window_bounds = array<i64: 16, 4>}, {pipeline_mode = #tpu.pipeline_mode<synchronous>, transform_indices = @transform_2, window_bounds = array<i64: 4, 32>}, {pipeline_mode = #tpu.pipeline_mode<synchronous>, transform_indices = @transform_3, window_bounds = array<i64: 1, 32>}, {pipeline_mode = #tpu.pipeline_mode<synchronous>, transform_indices = @transform_4, window_bounds = array<i64: 32, 128>}, {pipeline_mode = #tpu.pipeline_mode<synchronous>, transform_indices = @transform_5, window_bounds = array<i64: 1, 128>}, {transform_indices = @transform_6, window_bounds = array<i64: 16, 128>}]} {
    %c0 = arith.constant 0 : index
    %c0_0 = arith.constant 0 : index
    %0 = vector.load %arg1[%c0, %c0_0] : memref<16x16xf32, #tpu.memory_space<vmem>>, vector<16x16xf32>
    %c0_1 = arith.constant 0 : index
    %c0_2 = arith.constant 0 : index
    %1 = vector.load %arg2[%c0_1, %c0_2] : memref<16x4xf32, #tpu.memory_space<vmem>>, vector<16x4xf32>
    %cst = arith.constant dense<0.000000e+00> : vector<16x4xf32>
    %2 = tpu.matmul %0, %1, %cst {dimension_numbers = #tpu.dot_dimension_numbers<[1], [0], [0], [1], [0, 0, 1, 1], [], []>} : vector<16x16xf32>, vector<16x4xf32>, vector<16x4xf32> -> vector<16x4xf32>
    %c0_3 = arith.constant 0 : index
    %c0_4 = arith.constant 0 : index
    %3 = vector.load %arg3[%c0_3, %c0_4] : memref<4x32xf32, #tpu.memory_space<vmem>>, vector<4x32xf32>
    %cst_5 = arith.constant dense<0.000000e+00> : vector<16x32xf32>
    %4 = tpu.matmul %2, %3, %cst_5 {dimension_numbers = #tpu.dot_dimension_numbers<[1], [0], [0], [1], [0, 0, 1, 1], [], []>} : vector<16x4xf32>, vector<4x32xf32>, vector<16x32xf32> -> vector<16x32xf32>
    %c0_6 = arith.constant 0 : index
    %c0_7 = arith.constant 0 : index
    %5 = vector.load %arg4[%c0_6, %c0_7] : memref<1x32xf32, #tpu.memory_space<vmem>>, vector<1x32xf32>
    %6 = vector.broadcast %5 : vector<1x32xf32> to vector<16x32xf32>
    %7 = arith.addf %4, %6 : vector<16x32xf32>
    %cst_8 = arith.constant 0.000000e+00 : f32
    %8 = vector.broadcast %cst_8 : f32 to vector<16x32xf32>
    %9 = arith.maximumf %7, %8 : vector<16x32xf32>
    %c0_9 = arith.constant 0 : index
    %c0_10 = arith.constant 0 : index
    %10 = vector.load %arg5[%c0_9, %c0_10] : memref<32x128xf32, #tpu.memory_space<vmem>>, vector<32x128xf32>
    %cst_11 = arith.constant dense<0.000000e+00> : vector<16x128xf32>
    %11 = tpu.matmul %9, %10, %cst_11 {dimension_numbers = #tpu.dot_dimension_numbers<[1], [0], [0], [1], [0, 0, 1, 1], [], []>} : vector<16x32xf32>, vector<32x128xf32>, vector<16x128xf32> -> vector<16x128xf32>
    %c0_12 = arith.constant 0 : index
    %c0_13 = arith.constant 0 : index
    %12 = vector.load %arg6[%c0_12, %c0_13] : memref<1x128xf32, #tpu.memory_space<vmem>>, vector<1x128xf32>
    %13 = vector.broadcast %12 : vector<1x128xf32> to vector<16x128xf32>
    %14 = arith.addf %11, %13 : vector<16x128xf32>
    %c0_14 = arith.constant 0 : index
    %c0_15 = arith.constant 0 : index
    %15 = vector.load %arg7[%c0_14, %c0_15] : memref<16x128xf32, #tpu.memory_space<vmem>>, vector<16x128xf32>
    tpu.vector_store %arg7[%c0_14, %c0_15], %14 {strides = array<i32>} : memref<16x128xf32, #tpu.memory_space<vmem>>, vector<16x128xf32>,
    return
  }
  func.func @transform_0(%arg0: i32) -> (i32, i32) {
    %c0_i32 = arith.constant 0 : i32
    %c0_i32_0 = arith.constant 0 : i32
    %c0_i32_1 = arith.constant 0 : i32
    return %c0_i32, %c0_i32_0 : i32, i32
  }
  func.func @transform_1(%arg0: i32) -> (i32, i32) {
    %c0_i32 = arith.constant 0 : i32
    %c0_i32_0 = arith.constant 0 : i32
    return %arg0, %c0_i32 : i32, i32
  }
  func.func @transform_2(%arg0: i32) -> (i32, i32) {
    %c0_i32 = arith.constant 0 : i32
    %c0_i32_0 = arith.constant 0 : i32
    %c0_i32_1 = arith.constant 0 : i32
    return %c0_i32, %c0_i32_0 : i32, i32
  }
  func.func @transform_3(%arg0: i32) -> (i32, i32) {
    %c0_i32 = arith.constant 0 : i32
    %c0_i32_0 = arith.constant 0 : i32
    %c0_i32_1 = arith.constant 0 : i32
    return %c0_i32, %c0_i32_0 : i32, i32
  }
  func.func @transform_4(%arg0: i32) -> (i32, i32) {
    %c0_i32 = arith.constant 0 : i32
    %c0_i32_0 = arith.constant 0 : i32
    %c0_i32_1 = arith.constant 0 : i32
    return %c0_i32, %c0_i32_0 : i32, i32
  }
  func.func @transform_5(%arg0: i32) -> (i32, i32) {
    %c0_i32 = arith.constant 0 : i32
    %c0_i32_0 = arith.constant 0 : i32
    %c0_i32_1 = arith.constant 0 : i32
    return %c0_i32, %c0_i32_0 : i32, i32
  }
  func.func @transform_6(%arg0: i32) -> (i32, i32) {
    %c0_i32 = arith.constant 0 : i32
    %c0_i32_0 = arith.constant 0 : i32
    return %arg0, %c0_i32 : i32, i32
  }
}

</mosaic_0001>

<llo_original>
// kernel: tpu_custom_call.1
$region0: #{tpu_custom_call.1}
  #allocation0 [shape = 'u32[]', space=smem, size = 0x4, offset = 0x4, fixed_abs, tag = 'smem constant byte address 0x4 - core index']
  #allocation1 [shape = 'u32[144,128]{1,0:T(1,128)}', space=vmem, size = 0x12000, scoped, tag = 'internal scratch']
  %s0 = inlined_call_operand.vmem [shape: f32[16,16], index: 0, kind: input, shape index: {}]
  %s1 = inlined_call_operand.vmem [shape: f32[32,4], index: 1, kind: input, shape index: {}]
  %s2 = inlined_call_operand.hbm [shape: f32[4,32], index: 2, kind: input, shape index: {}]
  %s3 = inlined_call_operand.vmem [shape: f32[1,32], index: 3, kind: input, shape index: {}]
  %s4 = inlined_call_operand.vmem [shape: f32[32,128], index: 4, kind: input, shape index: {}]
  %s5 = inlined_call_operand.vmem [shape: f32[1,128], index: 5, kind: input, shape index: {}]
  %s6 = inlined_call_operand.hbm [shape: f32[32,128], index: 6, kind: output, shape index: {}]
  %s7 = sld [smem:[#allocation0]]
  $region61: #{tpu_custom_call.1} parent=0
    _
  %s9 = ssub.s32 1, %s7
  %s10 = scalar_select 0, %s9, %s7
  $region1: #{tpu_custom_call.1} parent=0
    #allocation2 [shape = 'u8[2048]{0}', space=vmem, size = 0x800, scoped, tag = 'input window, operand 2, single buffered']
    #allocation3 [shape = 's32[2]{0}', space=sflag, size = 0x8, scoped, tag = 'scoped memory for tpu_custom_call.1']
    #allocation4 [shape = 's32[2]{0}', space=sflag, size = 0x8, scoped, tag = 'scoped memory for tpu_custom_call.1']
    #allocation5 [shape = 'u8[16384]{0}', space=vmem, size = 0x4000, scoped, tag = 'output window, operand 0']
    %11 = vsyncpa [#allocation3], 0
    %12 = vsyncpa [#allocation4], 0
    %s13 = scalar_lea.sflag [#allocation4], 1
    %14 = vsyncpa %s13, 0
    loop: start=0, step=1, limit=4
    $region2: #{tpu_custom_call.1} parent=1 // loop_pre_header
      _
    $region3: #{tpu_custom_call.1} parent=1 // loop_header
      %s16 = sphi 0, %s20
      %p17 = scmp.ge.s32.totalorder %s16, 4
      %s24 = sphi 0, %s24
      %s26 = sphi 0, %s24
      %s27 = sphi 0, %s26
      %s41 = sphi 0, %s27
      %s47 = sphi 0, %s49
      %s50 = sphi 0, %s47
      %s51 = sphi 0, %s50
      %s67 = sphi 0, %s51
      %s71 = sphi 0, %s71
      %s73 = sphi 0, %s71
      %s74 = sphi 0, %s73
      %s88 = sphi 0, %s74
      %s92 = sphi 0, %s92
      %s94 = sphi 0, %s92
      %s95 = sphi 0, %s94
      %s109 = sphi 0, %s95
      %s113 = sphi 0, %s113
      %s115 = sphi 0, %s113
      %s116 = sphi 0, %s115
      %s130 = sphi 0, %s116
      %s134 = sphi 0, %s134
      %s136 = sphi 0, %s134
      %s137 = sphi 0, %s136
      %s151 = sphi 0, %s137
      %s157 = sphi 0, %s159
      %s160 = sphi 0, %s157
      %s161 = sphi 0, %s160
      %s177 = sphi 0, %s161
    $region4: #{tpu_custom_call.1} parent=1 // loop_header_branch
      %19 = sbr.rel (%p17) target = $region8
    $region5: #{tpu_custom_call.1} parent=1 // loop_body
      %s21 = ssub.s32 %s16, 1
      %s22 = ssub.s32 %s16, 2
      %s23 = sadd.s32 %s16, 1
      %s25 = sadd.s32 %s24, 1
      %p28 = scmp.eq.s32.totalorder %s16, 1
      %p29 = scmp.ne.s32.totalorder %s24, %s26
      %p30 = scmp.eq.s32.totalorder %s16, 0
      %p31 = por %p29, %p30
      %p32 = scmp.ne.s32.totalorder %s24, %s26
      %p33 = scmp.eq.s32.totalorder %s21, 1
      %p34 = por %p32, %p33
      %p35 = scmp.ne.s32.totalorder %s26, %s27
      %p36 = scmp.eq.s32.totalorder %s21, 0
      %p37 = por %p35, %p36
      %p38 = scmp.ne.s32.totalorder %s26, %s27
      %p39 = scmp.eq.s32.totalorder %s22, 1
      %p40 = por %p38, %p39
      %p42 = scmp.ne.s32.totalorder %s27, %s41
      %p43 = scmp.eq.s32.totalorder %s22, 0
      %p44 = por %p42, %p43
      %s45 = ssub.s32 %s16, %s23
      %p46 = scmp.eq.s32.totalorder %s45, 0
      %s48 = sadd.s32 %s47, 1
      %s49 = scalar_select %p46, %s47, %s48
      %p52 = pneg %p46
      %p53 = scmp.eq.s32.totalorder %s16, 1
      %p54 = por %p52, %p53
      %p55 = scmp.ne.s32.totalorder %s47, %s50
      %p56 = scmp.eq.s32.totalorder %s16, 0
      %p57 = por %p55, %p56
      %p58 = scmp.ne.s32.totalorder %s47, %s50
      %p59 = scmp.eq.s32.totalorder %s21, 1
      %p60 = por %p58, %p59
      %p61 = scmp.ne.s32.totalorder %s50, %s51
      %p62 = scmp.eq.s32.totalorder %s21, 0
      %p63 = por %p61, %p62
      %p64 = scmp.ne.s32.totalorder %s50, %s51
      %p65 = scmp.eq.s32.totalorder %s22, 1
      %p66 = por %p64, %p65
      %p68 = scmp.ne.s32.totalorder %s51, %s67
      %p69 = scmp.eq.s32.totalorder %s22, 0
      %p70 = por %p68, %p69
      %s72 = sadd.s32 %s71, 1
      %p75 = scmp.eq.s32.totalorder %s16, 1
      %p76 = scmp.ne.s32.totalorder %s71, %s73
      %p77 = scmp.eq.s32.totalorder %s16, 0
      %p78 = por %p76, %p77
      %p79 = scmp.ne.s32.totalorder %s71, %s73
      %p80 = scmp.eq.s32.totalorder %s21, 1
      %p81 = por %p79, %p80
      %p82 = scmp.ne.s32.totalorder %s73, %s74
      %p83 = scmp.eq.s32.totalorder %s21, 0
      %p84 = por %p82, %p83
      %p85 = scmp.ne.s32.totalorder %s73, %s74
      %p86 = scmp.eq.s32.totalorder %s22, 1
      %p87 = por %p85, %p86
      %p89 = scmp.ne.s32.totalorder %s74, %s88
      %p90 = scmp.eq.s32.totalorder %s22, 0
      %p91 = por %p89, %p90
      %s93 = sadd.s32 %s92, 1
      %p96 = scmp.eq.s32.totalorder %s16, 1
      %p97 = scmp.ne.s32.totalorder %s92, %s94
      %p98 = scmp.eq.s32.totalorder %s16, 0
      %p99 = por %p97, %p98
      %p100 = scmp.ne.s32.totalorder %s92, %s94
      %p101 = scmp.eq.s32.totalorder %s21, 1
      %p102 = por %p100, %p101
      %p103 = scmp.ne.s32.totalorder %s94, %s95
      %p104 = scmp.eq.s32.totalorder %s21, 0
      %p105 = por %p103, %p104
      %p106 = scmp.ne.s32.totalorder %s94, %s95
      %p107 = scmp.eq.s32.totalorder %s22, 1
      %p108 = por %p106, %p107
      %p110 = scmp.ne.s32.totalorder %s95, %s109
      %p111 = scmp.eq.s32.totalorder %s22, 0
      %p112 = por %p110, %p111
      %s114 = sadd.s32 %s113, 1
      %p117 = scmp.eq.s32.totalorder %s16, 1
      %p118 = scmp.ne.s32.totalorder %s113, %s115
      %p119 = scmp.eq.s32.totalorder %s16, 0
      %p120 = por %p118, %p119
      %p121 = scmp.ne.s32.totalorder %s113, %s115
      %p122 = scmp.eq.s32.totalorder %s21, 1
      %p123 = por %p121, %p122
      %p124 = scmp.ne.s32.totalorder %s115, %s116
      %p125 = scmp.eq.s32.totalorder %s21, 0
      %p126 = por %p124, %p125
      %p127 = scmp.ne.s32.totalorder %s115, %s116
      %p128 = scmp.eq.s32.totalorder %s22, 1
      %p129 = por %p127, %p128
      %p131 = scmp.ne.s32.totalorder %s116, %s130
      %p132 = scmp.eq.s32.totalorder %s22, 0
      %p133 = por %p131, %p132
      %s135 = sadd.s32 %s134, 1
      %p138 = scmp.eq.s32.totalorder %s16, 1
      %p139 = scmp.ne.s32.totalorder %s134, %s136
      %p140 = scmp.eq.s32.totalorder %s16, 0
      %p141 = por %p139, %p140
      %p142 = scmp.ne.s32.totalorder %s134, %s136
      %p143 = scmp.eq.s32.totalorder %s21, 1
      %p144 = por %p142, %p143
      %p145 = scmp.ne.s32.totalorder %s136, %s137
      %p146 = scmp.eq.s32.totalorder %s21, 0
      %p147 = por %p145, %p146
      %p148 = scmp.ne.s32.totalorder %s136, %s137
      %p149 = scmp.eq.s32.totalorder %s22, 1
      %p150 = por %p148, %p149
      %p152 = scmp.ne.s32.totalorder %s137, %s151
      %p153 = scmp.eq.s32.totalorder %s22, 0
      %p154 = por %p152, %p153
      %s155 = ssub.s32 %s16, %s23
      %p156 = scmp.eq.s32.totalorder %s155, 0
      %s158 = sadd.s32 %s157, 1
      %s159 = scalar_select %p156, %s157, %s158
      %p162 = pneg %p156
      %p163 = scmp.eq.s32.totalorder %s16, 1
      %p164 = por %p162, %p163
      %p165 = scmp.ne.s32.totalorder %s157, %s160
      %p166 = scmp.eq.s32.totalorder %s16, 0
      %p167 = por %p165, %p166
      %p168 = scmp.ne.s32.totalorder %s157, %s160
      %p169 = scmp.eq.s32.totalorder %s21, 1
      %p170 = por %p168, %p169
      %p171 = scmp.ne.s32.totalorder %s160, %s161
      %p172 = scmp.eq.s32.totalorder %s21, 0
      %p173 = por %p171, %p172
      %p174 = scmp.ne.s32.totalorder %s160, %s161
      %p175 = scmp.eq.s32.totalorder %s22, 1
      %p176 = por %p174, %p175
      %p178 = scmp.ne.s32.totalorder %s161, %s177
      %p179 = scmp.eq.s32.totalorder %s22, 0
      %p180 = por %p178, %p179
      %p181 = scmp.le.s32.totalorder 1, %s16
      %p182 = scmp.lt.s32.totalorder %s16, 3
      %p183 = pnand %p181, %p182
      %p184 = pneg %p183
      // Predicated region
      $region9: #{tpu_custom_call.1} parent=5 // pred_check
        _
      $region10: #{tpu_custom_call.1} parent=5 // pred_check_branch
        %186 = sbr.rel (%p183) target = $region12
      $region11: #{tpu_custom_call.1} parent=5 // pred_region
        %s187 = ssub.s32 %s16, 1
        // Predicated region
        $region13: #{tpu_custom_call.1} parent=11 // pred_check
          %p188 = pneg %p37
        $region14: #{tpu_custom_call.1} parent=11 // pred_check_branch
          %190 = sbr.rel (%p188) target = $region16
        $region15: #{tpu_custom_call.1} parent=11 // pred_region
          _
        $region16: #{tpu_custom_call.1} parent=11 // pred_fallthru
          _
        // Predicated region
        $region17: #{tpu_custom_call.1} parent=11 // pred_check
          %p191 = pneg %p84
        $region18: #{tpu_custom_call.1} parent=11 // pred_check_branch
          %193 = sbr.rel (%p191) target = $region20
        $region19: #{tpu_custom_call.1} parent=11 // pred_region
          %s195 = ssub.s32 64, 64
          %196 = vsyncadd [#allocation3], %s195
          %s198 = sshll.u32 [#allocation2], 4
          %s199 = int_to_ptr.vmem [resolvable:$true] %s198
          %201 = dma.hbm_to_vmem [thread:$0]  %s2, 64, %s199, [#allocation3]
        $region20: #{tpu_custom_call.1} parent=11 // pred_fallthru
          _
        // Predicated region
        $region21: #{tpu_custom_call.1} parent=11 // pred_check
          %p202 = pneg %p105
        $region22: #{tpu_custom_call.1} parent=11 // pred_check_branch
          %204 = sbr.rel (%p202) target = $region24
        $region23: #{tpu_custom_call.1} parent=11 // pred_region
          _
        $region24: #{tpu_custom_call.1} parent=11 // pred_fallthru
          _
        // Predicated region
        $region25: #{tpu_custom_call.1} parent=11 // pred_check
          %p205 = pneg %p126
        $region26: #{tpu_custom_call.1} parent=11 // pred_check_branch
          %207 = sbr.rel (%p205) target = $region28
        $region27: #{tpu_custom_call.1} parent=11 // pred_region
          _
        $region28: #{tpu_custom_call.1} parent=11 // pred_fallthru
          _
        // Predicated region
        $region29: #{tpu_custom_call.1} parent=11 // pred_check
          %p208 = pneg %p147
        $region30: #{tpu_custom_call.1} parent=11 // pred_check_branch
          %210 = sbr.rel (%p208) target = $region32
        $region31: #{tpu_custom_call.1} parent=11 // pred_region
          _
        $region32: #{tpu_custom_call.1} parent=11 // pred_fallthru
          _
      $region12: #{tpu_custom_call.1} parent=5 // pred_fallthru
        _
      %p211 = scmp.lt.s32.totalorder %s16, 2
      // Predicated region
      $region33: #{tpu_custom_call.1} parent=5 // pred_check
        %p212 = pneg %p211
      $region34: #{tpu_custom_call.1} parent=5 // pred_check_branch
        %214 = sbr.rel (%p212) target = $region36
      $region35: #{tpu_custom_call.1} parent=5 // pred_region
        // Predicated region
        $region37: #{tpu_custom_call.1} parent=35 // pred_check
          %p215 = pneg %p57
        $region38: #{tpu_custom_call.1} parent=35 // pred_check_branch
          %217 = sbr.rel (%p215) target = $region40
        $region39: #{tpu_custom_call.1} parent=35 // pred_region
          %s218 = smul.u32 2, %s16
          %p219 = scmp.lt.s32.totalorder %s218, 3
          %s220 = scalar_select %p219, %s218, 3
          %s221 = smul.addr %s220, 8
          %s222 = scalar_lea.vmem %s1, %s221
          %s223 = smul.u32 2, %s16
        $region40: #{tpu_custom_call.1} parent=35 // pred_fallthru
          _
      $region36: #{tpu_custom_call.1} parent=5 // pred_fallthru
        _
      %p224 = scmp.le.s32.totalorder 1, %s16
      %p225 = scmp.lt.s32.totalorder %s16, 3
      %p226 = pnand %p224, %p225
      %p227 = pneg %p226
      // Predicated region
      $region41: #{tpu_custom_call.1} parent=5 // pred_check
        _
      $region42: #{tpu_custom_call.1} parent=5 // pred_check_branch
        %229 = sbr.rel (%p226) target = $region44
      $region43: #{tpu_custom_call.1} parent=5 // pred_region
        %s230 = ssub.s32 %s16, 1
        // Predicated region
        $region45: #{tpu_custom_call.1} parent=43 // pred_check
          %p231 = pneg %p84
        $region46: #{tpu_custom_call.1} parent=43 // pred_check_branch
          %233 = sbr.rel (%p231) target = $region48
        $region47: #{tpu_custom_call.1} parent=43 // pred_region
          %234 = dma.done [#allocation3], 64
        $region48: #{tpu_custom_call.1} parent=43 // pred_fallthru
          _
        %p235 = pneg %p37
        %p236 = pneg %p34
        %s237 = smul.u32 2, %s21
        %p238 = scmp.lt.s32.totalorder %s237, 3
        %s239 = scalar_select %p238, %s237, 3
        %s240 = smul.addr %s239, 8
        %s241 = scalar_lea.vmem %s1, %s240
        %p242 = pneg %p63
        %p243 = pneg %p60
        %p244 = pneg %p84
        %p245 = pneg %p81
        %p246 = pneg %p105
        %p247 = pneg %p102
        %p248 = pneg %p126
        %p249 = pneg %p123
        %p250 = pneg %p147
        %p251 = pneg %p144
        %p252 = pneg %p173
        %p253 = pneg %p170
        %s254 = sand.u32 %s160, 1
        %s255 = scalar_lea.sflag [#allocation4], %s254
        %s256 = sand.u32 %s160, 1
        %s257 = smul.addr %s256, 16
        %s258 = scalar_lea.vmem [#allocation5], %s257
        %s259 = smul.u32 2, %s21
        %p260 = scmp.lt.s32.totalorder %s259, 3
        %s261 = scalar_select %p260, %s259, 3
        %s262 = smul.addr %s261, 8
        %s263 = scalar_lea.vmem %s1, %s262
        %s264 = smul.u32 2, %s21
        %s265 = smul.u32 2, %s21
        %v266 = vld [vmem:[%s0] sm:$0xff]
        %v267 = vld [vmem:[%s0 + $0x8] sm:$0xff]
        %v268 = vld [vmem:[%s263] sm:$0xff]
        %v269 = vld [vmem:[%s263 + $0x8] sm:$0xff]
        %vm270 = vcmask 130048
        %v272 = vsel %vm270, %v266, 0
        %v275 = vsel %vm270, %v267, 0
        %277 = vmatprep.subr.mxu0 0.0
        %278 = vmatpush1.msra.mxu0 %v268
        %279 = vmatprep.subr.mxu0 0.0
        %280 = vmatpush1.msra.mxu0 %v269
        %281 = vmatprep.subr.mxu0 0.0
        %282 = vmatpush1.msra.mxu0 0.0
        %283 = vmatprep.subr.mxu0 0.0
        %284 = vmatpush1.msra.mxu0 0.0
        %285 = vmatprep.subr.mxu0 0.0
        %286 = vmatpush1.msra.mxu0 0.0
        %287 = vmatprep.subr.mxu0 0.0
        %288 = vmatpush1.msra.mxu0 0.0
        %289 = vmatprep.subr.mxu0 0.0
        %290 = vmatpush1.msra.mxu0 0.0
        %291 = vmatprep.subr.mxu0 0.0
        %292 = vmatpush1.msra.mxu0 0.0
        %293 = vmatprep.subr.mxu0 0.0
        %294 = vmatpush1.msra.mxu0 0.0
        %295 = vmatprep.subr.mxu0 0.0
        %296 = vmatpush1.msra.mxu0 0.0
        %297 = vmatprep.subr.mxu0 0.0
        %298 = vmatpush1.msra.mxu0 0.0
        %299 = vmatprep.subr.mxu0 0.0
        %300 = vmatpush1.msra.mxu0 0.0
        %301 = vmatprep.subr.mxu0 0.0
        %302 = vmatpush1.msra.mxu0 0.0
        %303 = vmatprep.subr.mxu0 0.0
        %304 = vmatpush1.msra.mxu0 0.0
        %305 = vmatprep.subr.mxu0 0.0
        %306 = vmatpush1.msra.mxu0 0.0
        %307 = vmatprep.subr.mxu0 0.0
        %308 = vmatpush1.msra.mxu0 0.0
        %309 = vmatprep.subr.mxu0 0.0
        %310 = vmatpush1.msra.mxu0 0.0
        %311 = vmatprep.subr.mxu0 0.0
        %312 = vmatpush1.msra.mxu0 0.0
        %313 = vmatprep.subr.mxu0 0.0
        %314 = vmatpush1.msra.mxu0 0.0
        %315 = vmatprep.subr.mxu0 0.0
        %316 = vmatpush1.msra.mxu0 0.0
        %317 = vmatprep.subr.mxu0 0.0
        %318 = vmatpush1.msra.mxu0 0.0
        %319 = vmatprep.subr.mxu0 0.0
        %320 = vmatpush1.msra.mxu0 0.0
        %321 = vmatprep.subr.mxu0 0.0
        %322 = vmatpush1.msra.mxu0 0.0
        %323 = vmatprep.subr.mxu0 0.0
        %324 = vmatpush1.msra.mxu0 0.0
        %325 = vmatprep.subr.mxu0 0.0
        %326 = vmatpush1.msra.mxu0 0.0
        %327 = vmatprep.subr.mxu0 0.0
        %328 = vmatpush1.msra.mxu0 0.0
        %329 = vmatprep.subr.mxu0 0.0
        %330 = vmatpush1.msra.mxu0 0.0
        %331 = vmatprep.subr.mxu0 0.0
        %332 = vmatpush1.msra.mxu0 0.0
        %333 = vmatprep.subr.mxu0 0.0
        %334 = vmatpush1.msra.mxu0 0.0
        %335 = vmatprep.subr.mxu0 0.0
        %336 = vmatpush1.msra.mxu0 0.0
        %337 = vmatprep.subr.mxu0 0.0
        %338 = vmatpush1.msra.mxu0 0.0
        %339 = vmatprep.subr.mxu0 0.0
        %340 = vmatpush1.msra.mxu0 0.0
        %341 = vmatprep.mubr.f32.mxu0 0.0
        %342 = vmatmul.mubr.f32.gmra.mrb[0].mxu0 %v272
        %v343 = vpop.f32.mrb[0].mxu0
        %v344 = vadd.f32 0.0, %v343
        %v345 = vpop.f32.mrb[0].mxu0
        %346 = vmatprep.mubr.f32.mxu0 0.0
        %347 = vmatmul.mubr.f32.gmra.mrb[0].mxu0 %v275
        %v348 = vpop.f32.mrb[0].mxu0
        %v349 = vadd.f32 0.0, %v348
        %v350 = vpop.f32.mrb[0].mxu0
        %351 = vdwg.mxu0
        %v352 = vld [vmem:[#allocation2] sm:$0xf]
        %v353 = vld [vmem:[%s3] sm:$0x1]
        %v355 = vlaneseq
        %v356 = vshrl.u32 %v355, 7
        %v357 = vsub.s32 0, %v356
        %v358 = vrot.slane %v353, %v357
        %vm360 = vcmask 31744
        %v362 = vsel %vm360, %v344, 0
        %v365 = vsel %vm360, %v349, 0
        %vm367 = vcmask 1043456
        %v369 = vsel %vm367, %v352, 0
        %371 = vmatprep.subr.mxu0 0.0
        %372 = vmatpush1.msra.mxu0 %v369
        %373 = vmatprep.subr.mxu0 0.0
        %374 = vmatpush1.msra.mxu0 0.0
        %375 = vmatprep.subr.mxu0 0.0
        %376 = vmatpush1.msra.mxu0 0.0
        %377 = vmatprep.subr.mxu0 0.0
        %378 = vmatpush1.msra.mxu0 0.0
        %379 = vmatprep.subr.mxu0 0.0
        %380 = vmatpush1.msra.mxu0 0.0
        %381 = vmatprep.subr.mxu0 0.0
        %382 = vmatpush1.msra.mxu0 0.0
        %383 = vmatprep.subr.mxu0 0.0
        %384 = vmatpush1.msra.mxu0 0.0
        %385 = vmatprep.subr.mxu0 0.0
        %386 = vmatpush1.msra.mxu0 0.0
        %387 = vmatprep.subr.mxu0 0.0
        %388 = vmatpush1.msra.mxu0 0.0
        %389 = vmatprep.subr.mxu0 0.0
        %390 = vmatpush1.msra.mxu0 0.0
        %391 = vmatprep.subr.mxu0 0.0
        %392 = vmatpush1.msra.mxu0 0.0
        %393 = vmatprep.subr.mxu0 0.0
        %394 = vmatpush1.msra.mxu0 0.0
        %395 = vmatprep.subr.mxu0 0.0
        %396 = vmatpush1.msra.mxu0 0.0
        %397 = vmatprep.subr.mxu0 0.0
        %398 = vmatpush1.msra.mxu0 0.0
        %399 = vmatprep.subr.mxu0 0.0
        %400 = vmatpush1.msra.mxu0 0.0
        %401 = vmatprep.subr.mxu0 0.0
        %402 = vmatpush1.msra.mxu0 0.0
        %403 = vmatprep.subr.mxu0 0.0
        %404 = vmatpush1.msra.mxu0 0.0
        %405 = vmatprep.subr.mxu0 0.0
        %406 = vmatpush1.msra.mxu0 0.0
        %407 = vmatprep.subr.mxu0 0.0
        %408 = vmatpush1.msra.mxu0 0.0
        %409 = vmatprep.subr.mxu0 0.0
        %410 = vmatpush1.msra.mxu0 0.0
        %411 = vmatprep.subr.mxu0 0.0
        %412 = vmatpush1.msra.mxu0 0.0
        %413 = vmatprep.subr.mxu0 0.0
        %414 = vmatpush1.msra.mxu0 0.0
        %415 = vmatprep.subr.mxu0 0.0
        %416 = vmatpush1.msra.mxu0 0.0
        %417 = vmatprep.subr.mxu0 0.0
        %418 = vmatpush1.msra.mxu0 0.0
        %419 = vmatprep.subr.mxu0 0.0
        %420 = vmatpush1.msra.mxu0 0.0
        %421 = vmatprep.subr.mxu0 0.0
        %422 = vmatpush1.msra.mxu0 0.0
        %423 = vmatprep.subr.mxu0 0.0
        %424 = vmatpush1.msra.mxu0 0.0
        %425 = vmatprep.subr.mxu0 0.0
        %426 = vmatpush1.msra.mxu0 0.0
        %427 = vmatprep.subr.mxu0 0.0
        %428 = vmatpush1.msra.mxu0 0.0
        %429 = vmatprep.subr.mxu0 0.0
        %430 = vmatpush1.msra.mxu0 0.0
        %431 = vmatprep.subr.mxu0 0.0
        %432 = vmatpush1.msra.mxu0 0.0
        %433 = vmatprep.subr.mxu0 0.0
        %434 = vmatpush1.msra.mxu0 0.0
        %435 = vmatprep.mubr.f32.mxu0 0.0
        %436 = vmatmul.mubr.f32.gmra.mrb[0].mxu0 %v362
        %v437 = vpop.f32.mrb[0].mxu0
        %v438 = vadd.f32 %v358, %v437
        %v439 = vpop.f32.mrb[0].mxu0
        %440 = vmatprep.mubr.f32.mxu0 0.0
        %441 = vmatmul.mubr.f32.gmra.mrb[0].mxu0 %v365
        %v442 = vpop.f32.mrb[0].mxu0
        %v443 = vadd.f32 %v358, %v442
        %v444 = vpop.f32.mrb[0].mxu0
        %445 = vdwg.mxu0
        %v446 = vmax.f32 %v438, 0.0
        %v447 = vmax.f32 %v443, 0.0
        %v448 = vld [vmem:[%s4] sm:$0xff]
        %v449 = vld [vmem:[%s4 + $0x8] sm:$0xff]
        %v450 = vld [vmem:[%s4 + $0x10] sm:$0xff]
        %v451 = vld [vmem:[%s4 + $0x18] sm:$0xff]
        %v452 = vld [vmem:[%s5] sm:$0x1]
        %v454 = vlaneseq
        %v455 = vshrl.u32 %v454, 7
        %v456 = vsub.s32 0, %v455
        %v457 = vrot.slane %v452, %v456
        %vm459 = vcmask 261120
        %v461 = vsel %vm459, %v446, 0
        %v464 = vsel %vm459, %v447, 0
        %466 = vmatprep.subr.mxu0 0.0
        %467 = vmatpush1.msra.mxu0 %v448
        %468 = vmatprep.subr.mxu0 0.0
        %469 = vmatpush1.msra.mxu0 %v449
        %470 = vmatprep.subr.mxu0 0.0
        %471 = vmatpush1.msra.mxu0 %v450
        %472 = vmatprep.subr.mxu0 0.0
        %473 = vmatpush1.msra.mxu0 %v451
        %474 = vmatprep.subr.mxu0 0.0
        %475 = vmatpush1.msra.mxu0 0.0
        %476 = vmatprep.subr.mxu0 0.0
        %477 = vmatpush1.msra.mxu0 0.0
        %478 = vmatprep.subr.mxu0 0.0
        %479 = vmatpush1.msra.mxu0 0.0
        %480 = vmatprep.subr.mxu0 0.0
        %481 = vmatpush1.msra.mxu0 0.0
        %482 = vmatprep.subr.mxu0 0.0
        %483 = vmatpush1.msra.mxu0 0.0
        %484 = vmatprep.subr.mxu0 0.0
        %485 = vmatpush1.msra.mxu0 0.0
        %486 = vmatprep.subr.mxu0 0.0
        %487 = vmatpush1.msra.mxu0 0.0
        %488 = vmatprep.subr.mxu0 0.0
        %489 = vmatpush1.msra.mxu0 0.0
        %490 = vmatprep.subr.mxu0 0.0
        %491 = vmatpush1.msra.mxu0 0.0
        %492 = vmatprep.subr.mxu0 0.0
        %493 = vmatpush1.msra.mxu0 0.0
        %494 = vmatprep.subr.mxu0 0.0
        %495 = vmatpush1.msra.mxu0 0.0
        %496 = vmatprep.subr.mxu0 0.0
        %497 = vmatpush1.msra.mxu0 0.0
        %498 = vmatprep.subr.mxu0 0.0
        %499 = vmatpush1.msra.mxu0 0.0
        %500 = vmatprep.subr.mxu0 0.0
        %501 = vmatpush1.msra.mxu0 0.0
        %502 = vmatprep.subr.mxu0 0.0
        %503 = vmatpush1.msra.mxu0 0.0
        %504 = vmatprep.subr.mxu0 0.0
        %505 = vmatpush1.msra.mxu0 0.0
        %506 = vmatprep.subr.mxu0 0.0
        %507 = vmatpush1.msra.mxu0 0.0
        %508 = vmatprep.subr.mxu0 0.0
        %509 = vmatpush1.msra.mxu0 0.0
        %510 = vmatprep.subr.mxu0 0.0
        %511 = vmatpush1.msra.mxu0 0.0
        %512 = vmatprep.subr.mxu0 0.0
        %513 = vmatpush1.msra.mxu0 0.0
        %514 = vmatprep.subr.mxu0 0.0
        %515 = vmatpush1.msra.mxu0 0.0
        %516 = vmatprep.subr.mxu0 0.0
        %517 = vmatpush1.msra.mxu0 0.0
        %518 = vmatprep.subr.mxu0 0.0
        %519 = vmatpush1.msra.mxu0 0.0
        %520 = vmatprep.subr.mxu0 0.0
        %521 = vmatpush1.msra.mxu0 0.0
        %522 = vmatprep.subr.mxu0 0.0
        %523 = vmatpush1.msra.mxu0 0.0
        %524 = vmatprep.subr.mxu0 0.0
        %525 = vmatpush1.msra.mxu0 0.0
        %526 = vmatprep.subr.mxu0 0.0
        %527 = vmatpush1.msra.mxu0 0.0
        %528 = vmatprep.subr.mxu0 0.0
        %529 = vmatpush1.msra.mxu0 0.0
        %530 = vmatprep.mubr.f32.mxu0 0.0
        %531 = vmatmul.mubr.f32.gmra.mrb[0].mxu0 %v461
        %v532 = vpop.f32.mrb[0].mxu0
        %v533 = vadd.f32 %v457, %v532
        %v534 = vpop.f32.mrb[0].mxu0
        %535 = vmatprep.mubr.f32.mxu0 0.0
        %536 = vmatmul.mubr.f32.gmra.mrb[0].mxu0 %v464
        %v537 = vpop.f32.mrb[0].mxu0
        %v538 = vadd.f32 %v457, %v537
        %v539 = vpop.f32.mrb[0].mxu0
        %540 = vdwg.mxu0
        %541 = vst [vmem:[%s258] sm:$0xff] %v533
        %542 = vst [vmem:[%s258 + $0x8] sm:$0xff] %v538
        %s543 = sand.u32 %s160, 1
        %s544 = scalar_lea.sflag [#allocation4], %s543
        %s545 = sand.u32 %s160, 1
        %s546 = smul.addr %s545, 16
        %s547 = scalar_lea.vmem [#allocation5], %s546
        // Predicated region
        $region49: #{tpu_custom_call.1} parent=43 // pred_check
          %p548 = pneg %p170
        $region50: #{tpu_custom_call.1} parent=43 // pred_check_branch
          %550 = sbr.rel (%p548) target = $region52
        $region51: #{tpu_custom_call.1} parent=43 // pred_region
          %s551 = smul.u32 2, %s21
          %s553 = ssub.s32 256, 256
          %554 = vsyncadd %s544, %s553
          %s555 = smul.addr %s551, 128
          %s556 = scalar_lea.hbm %s6, %s555
          %s557 = sshll.u32 %s547, 4
          %s558 = int_to_ptr.vmem [resolvable:$true] %s557
          %563 = dma.vmem_to_hbm [thread:$0]  %s558, 256, %s556, %s544, 128, 128, 8
        $region52: #{tpu_custom_call.1} parent=43 // pred_fallthru
          _
      $region44: #{tpu_custom_call.1} parent=5 // pred_fallthru
        _
      %p564 = scmp.le.s32.totalorder 2, %s16
      // Predicated region
      $region53: #{tpu_custom_call.1} parent=5 // pred_check
        %p565 = pneg %p564
      $region54: #{tpu_custom_call.1} parent=5 // pred_check_branch
        %567 = sbr.rel (%p565) target = $region56
      $region55: #{tpu_custom_call.1} parent=5 // pred_region
        %s568 = ssub.s32 %s16, 2
        // Predicated region
        $region57: #{tpu_custom_call.1} parent=55 // pred_check
          %p569 = pneg %p176
        $region58: #{tpu_custom_call.1} parent=55 // pred_check_branch
          %571 = sbr.rel (%p569) target = $region60
        $region59: #{tpu_custom_call.1} parent=55 // pred_region
          %s572 = sand.u32 %s161, 1
          %s573 = scalar_lea.sflag [#allocation4], %s572
          %s574 = sand.u32 %s161, 1
          %s575 = smul.addr %s574, 16
          %s576 = scalar_lea.vmem [#allocation5], %s575
          %577 = dma.done %s573, 256
        $region60: #{tpu_custom_call.1} parent=55 // pred_fallthru
          _
      $region56: #{tpu_custom_call.1} parent=5 // pred_fallthru
        _
    $region6: #{tpu_custom_call.1} parent=1 // loop_footer
      %s20 = sadd.s32 1, %s16
    $region7: #{tpu_custom_call.1} parent=1 // loop_footer_branch
      %15 = sbr.rel target = $region3
    $region8: #{tpu_custom_call.1} parent=1 // loop_exit
      _
    %578 = vsyncpa [#allocation3], 1
    %s579 = scalar_lea.sflag [#allocation3], 1
    %580 = vsyncpa %s579, 1
    %581 = vsyncpa [#allocation4], 1
    %s582 = scalar_lea.sflag [#allocation4], 1
    %583 = vsyncpa %s582, 1

</llo_original>
